<compile_context>
chip_gen: v5e
topology: v5e:2x2
jax: 0.10.0
libtpu: 0.0.40
codegen_flags: <defaults>
</compile_context>

<pallas_src>
import functools

import jax
import jax.numpy as jnp
import numpy as np
from jax import lax
from jax.experimental import pallas as pl
from jax.experimental.pallas import tpu as pltpu


def _fastmax_kernel(qs_ref, ks_ref, q_ref, k_ref, va_ref, o_ref, *scratch,
                    a0, a1, a2, p, normalize, mm_dtype, approx_recip):
  """One grid step: G heads x one q tile.

  Block shapes:
    qs_ref, ks_ref : (G, 1, 1)     per-head normalization scales
    q_ref, o_ref   : (G, TQ, D)
    k_ref          : (G, N, D)     full sequence, resident across q tiles
    va_ref         : (G, N, D+1)   V augmented with a ones column (wrapper)
  Scratch (persists across q tiles of the same head group):
    s0 : (G, 1, D+1)        a0 * sum_n [v | 1]
    s1 : (G, D, D+1)        a1 * k^T @ [v | 1]
    s2 : (G*D, D, D+1)      a2 * (k * k[:, c])^T @ [v | 1]   (p == 2 only)
    acc: (TQ, D+1)          per-(head, q-tile) accumulator
  Column D of every stat is the fused denominator term.
  """
  if p == 2:
    s0_ref, s1_ref, s2_ref, acc_ref = scratch
  else:
    s0_ref, s1_ref, acc_ref = scratch
    s2_ref = None

  g_heads, n_kv, d = k_ref.shape
  j = pl.program_id(1)

  # ---- K/V statistics: computed once per head group (first q tile only) ----
  @pl.when(j == 0)
  def _():
    for g in range(g_heads):
      k_g = k_ref[g].astype(jnp.float32)                   # (N, D)
      if normalize:
        k_g = k_g * ks_ref[g]                              # (1, 1) broadcast
      v_aug = va_ref[g].astype(jnp.float32)                # (N, D+1)
      s0_ref[g] = a0 * jnp.sum(v_aug, axis=0, keepdims=True)
      kt_v = lax.dot_general(k_g.astype(mm_dtype), v_aug.astype(mm_dtype),
                             (((0,), (0,)), ((), ())),
                             preferred_element_type=jnp.float32)
      s1_ref[g] = (a1 * kt_v).astype(s1_ref.dtype)
      if p == 2:
        # Per-column contraction: never builds an (N, d^2) k2 array.
        for c in range(d):
          k2c = k_g * k_g[:, c:c + 1]                      # (N, D)
          k2t_v = lax.dot_general(k2c.astype(mm_dtype), v_aug.astype(mm_dtype),
                                  (((0,), (0,)), ((), ())),
                                  preferred_element_type=jnp.float32)
          s2_ref[g * d + c] = (a2 * k2t_v).astype(s2_ref.dtype)

  # ---- q tile -> output -----------------------------------------------------
  for g in range(g_heads):
    q_g = q_ref[g].astype(jnp.float32)                     # (TQ, D)
    if normalize:
      q_g = q_g * qs_ref[g]
    q_mm = q_g.astype(mm_dtype)
    # Numerator and denominator come out of the same matmul (fused via the
    # ones column of v_aug baked into the stats).
    acc_ref[...] = s0_ref[g] + lax.dot_general(
        q_mm, s1_ref[g], (((1,), (0,)), ((), ())),
        preferred_element_type=jnp.float32)
    if p == 2:
      # Static unrolled loop over feature columns; the accumulator lives in
      # VMEM so live ranges stay bounded and no (TQ, d^2) q2 is materialized.
      for c in range(d):
        q2c = (q_g * q_g[:, c:c + 1]).astype(mm_dtype)
        acc_ref[...] = acc_ref[...] + lax.dot_general(
            q2c, s2_ref[g * d + c], (((1,), (0,)), ((), ())),
            preferred_element_type=jnp.float32)
    acc = acc_ref[...]
    num = acc[:, :d]
    den = acc[:, d:]
    if approx_recip:
      out_g = num * pl.reciprocal(den, approx=True)
    else:
      out_g = num / den
    o_ref[g] = out_g.astype(o_ref.dtype)


def _pick_q_tile(n, max_rows):
  """Largest q-tile <= max_rows that is a multiple of 8 and divides n."""
  if n <= max_rows:
    return n
  t = (max_rows // 8) * 8
  while t >= 8:
    if n % t == 0:
      return t
    t -= 8
  return n  # fall back: whole sequence in one tile


def fastmax_attention(q, k, v, *, mask=False, dropout=0.0, normalize=False,
                      temperature=1.0, a0=1.0, a1=1.0, a2=0.5, lim=1.0, p=2,
                      matmul_dtype=None, approx_recip=False,
                      max_q_rows=512, max_heads_per_block=4):
  """Pallas TPU implementation of FASTMultiHeadAttention.forward (mask=False)."""
  assert not mask, "masked (causal cumsum) path not implemented in this kernel"
  assert dropout == 0.0, "dropout > 0 not implemented"
  assert p in (1, 2)
  del temperature  # forced to 1 by the reference code on this (unmasked) path.

  b, h, n, d = q.shape
  bh = b * h
  qf = q.reshape(bh, n, d)
  kf = k.reshape(bh, n, d)
  vf = v.reshape(bh, n, d)

  # Augment V with a ones column in the wrapper (cheap XLA concat) so the
  # denominator is produced by the same MXU passes as the numerator and the
  # kernel never does an in-kernel concatenate/relayout.
  v_aug = jnp.concatenate(
      [vf.astype(jnp.float32), jnp.ones((bh, n, 1), jnp.float32)], axis=-1)

  # Per-head normalization scales: cheap wrapper pre-pass so q can be tiled
  # inside the kernel without changing the max-norm semantics.
  if normalize:
    q32 = qf.astype(jnp.float32)
    k32 = kf.astype(jnp.float32)
    q_scale = lim / jnp.max(jnp.sqrt(jnp.sum(q32 * q32, axis=-1)), axis=-1)
    k_scale = lim / jnp.max(jnp.sqrt(jnp.sum(k32 * k32, axis=-1)), axis=-1)
  else:
    q_scale = jnp.ones((bh,), jnp.float32)
    k_scale = jnp.ones((bh,), jnp.float32)
  q_scale = q_scale.reshape(bh, 1, 1).astype(jnp.float32)
  k_scale = k_scale.reshape(bh, 1, 1).astype(jnp.float32)

  mm_dtype = jnp.dtype(matmul_dtype if matmul_dtype is not None else jnp.float32)

  tq = _pick_q_tile(n, max_q_rows)
  da = d + 1
  itemsize = jnp.dtype(q.dtype).itemsize
  mm_size = mm_dtype.itemsize

  def vmem_cost(g):
    # double-buffered q, o, k (input dtype) and v_aug (f32) + resident stats.
    io = 2 * g * (2 * tq * d * itemsize + n * d * itemsize + n * da * 4)
    stats = g * (da * 4 + d * da * mm_size
                 + (d * d * da * mm_size if p == 2 else 0))
    return io + stats + tq * da * 4

  budget = 40 << 20                      # keep under ~48 MiB for a v7x TC
  g_sel = 1
  for g in range(min(max_heads_per_block, bh), 0, -1):
    if bh % g == 0 and vmem_cost(g) <= budget:
      g_sel = g
      break
  vmem_limit = int(min(max(vmem_cost(g_sel) + (8 << 20), 32 << 20), 48 << 20))

  kernel = functools.partial(
      _fastmax_kernel, a0=float(a0), a1=float(a1), a2=float(a2), p=int(p),
      normalize=bool(normalize), mm_dtype=mm_dtype,
      approx_recip=bool(approx_recip))

  scale_spec = pl.BlockSpec((g_sel, 1, 1), lambda i, j: (i, 0, 0))
  q_spec = pl.BlockSpec((g_sel, tq, d), lambda i, j: (i, j, 0))
  k_spec = pl.BlockSpec((g_sel, n, d), lambda i, j: (i, 0, 0))    # j-independent
  va_spec = pl.BlockSpec((g_sel, n, da), lambda i, j: (i, 0, 0))  # j-independent

  scratch = [pltpu.VMEM((g_sel, 1, da), jnp.float32),
             pltpu.VMEM((g_sel, d, da), mm_dtype)]
  if p == 2:
    scratch.append(pltpu.VMEM((g_sel * d, d, da), mm_dtype))
  scratch.append(pltpu.VMEM((tq, da), jnp.float32))

  out = pl.pallas_call(
      kernel,
      out_shape=jax.ShapeDtypeStruct((bh, n, d), q.dtype),
      grid_spec=pltpu.PrefetchScalarGridSpec(
          num_scalar_prefetch=0,
          grid=(bh // g_sel, n // tq),
          in_specs=[scale_spec, scale_spec, q_spec, k_spec, va_spec],
          out_specs=q_spec,
          scratch_shapes=scratch),
      compiler_params=pltpu.CompilerParams(
          dimension_semantics=("parallel", "arbitrary"),
          vmem_limit_bytes=vmem_limit),
  )(q_scale, k_scale, qf, kf, v_aug)
  return out.reshape(b, h, n, d)


def _fastmax_reference(q, k, v, *, normalize, a0, a1, a2, lim, p):
  """Pure-numpy transcription of the PyTorch fastmax_function (mask=0)."""
  q = np.asarray(q, np.float64)
  k = np.asarray(k, np.float64)
  v = np.asarray(v, np.float64)
  if normalize:
    qn = np.linalg.norm(q, axis=3)
    kn = np.linalg.norm(k, axis=3)
    q = lim * q / np.max(qn, axis=2)[..., None, None]
    k = lim * k / np.max(kn, axis=2)[..., None, None]
  temperature = 1.0
  t2 = temperature * temperature
  first = a0 * np.sum(v, -2)
  second = a1 * np.matmul(np.swapaxes(k, -2, -1), v) / temperature
  ans = np.matmul(q, second)
  div = a0 * k.shape[2] + np.matmul(
      q, a1 * np.sum(k, -2)[..., None]) / temperature
  if p == 2:
    k2 = (k[..., :, None] @ k[..., None, :]).reshape(*k.shape[:3], -1)
    q2 = (q[..., :, None] @ q[..., None, :]).reshape(*q.shape[:3], -1)
    third = a2 * np.matmul(np.swapaxes(k2, -2, -1), v) / t2
    ans = ans + np.matmul(q2, third)
    div = div + np.matmul(q2, a2 * np.sum(k2, -2)[..., None]) / t2
  ans = ans + first[:, :, None, :]
  return ans / div


if __name__ == "__main__":
  # 1) Shapes and globals from the reference script: b=2, h=2, n=3, d=2,
  #    mask=False, normalize=True, p=1.
  b, h, n, d = 2, 2, 3, 2
  kq, kk, kv = jax.random.split(jax.random.PRNGKey(0), 3)
  q = jax.random.normal(kq, (b, h, n, d), dtype=jnp.float32)
  k = jax.random.normal(kk, (b, h, n, d), dtype=jnp.float32)
  v = jax.random.normal(kv, (b, h, n, d), dtype=jnp.float32)

  params1 = dict(normalize=True, a0=1.0, a1=1.0, a2=0.5, lim=1.0, p=1)
  out1 = jax.block_until_ready(
      fastmax_attention(q, k, v, mask=False, dropout=0.0, **params1))
  ref1 = _fastmax_reference(q, k, v, **params1)
  np.testing.assert_allclose(np.asarray(out1), ref1, rtol=1e-4, atol=1e-4)

  # 2) Module forward defaults: mask=False, normalize=False, p=2, a2=0.5.
  params2 = dict(normalize=False, a0=1.0, a1=1.0, a2=0.5, lim=1.0, p=2)
  out2 = jax.block_until_ready(
      fastmax_attention(q, k, v, mask=False, dropout=0.0, **params2))
  ref2 = _fastmax_reference(q, k, v, **params2)
  np.testing.assert_allclose(np.asarray(out2), ref2, rtol=1e-4, atol=1e-4)

  # 3) Slightly larger tile-aligned case exercising q-tiling (4 q tiles per
  #    head group), head batching (G=2), and the once-per-group KV stats
  #    scratch persisting across q tiles.
  b3, h3, n3, d3 = 1, 4, 64, 8
  kq3, kk3, kv3 = jax.random.split(jax.random.PRNGKey(1), 3)
  q3 = jax.random.normal(kq3, (b3, h3, n3, d3), dtype=jnp.float32)
  k3 = jax.random.normal(kk3, (b3, h3, n3, d3), dtype=jnp.float32)
  v3 = jax.random.normal(kv3, (b3, h3, n3, d3), dtype=jnp.float32)
  params3 = dict(normalize=True, a0=1.0, a1=1.0, a2=0.5, lim=1.0, p=2)
  out3 = jax.block_until_ready(
      fastmax_attention(q3, k3, v3, mask=False, dropout=0.0,
                        max_q_rows=16, max_heads_per_block=2, **params3))
  ref3 = _fastmax_reference(q3, k3, v3, **params3)
  np.testing.assert_allclose(np.asarray(out3), ref3, rtol=1e-4, atol=1e-4)

  print("KERNEL_OK")
</pallas_src>

<mosaic_0001>
module attributes {stable_mosaic.version = 11 : i64} {
  func.func @_fastmax_kernel(%arg0: i32, %arg1: i32, %arg2: memref<4x1x1xf32, #tpu.memory_space<vmem>>, %arg3: memref<4x1x1xf32, #tpu.memory_space<vmem>>, %arg4: memref<4x3x2xf32, #tpu.memory_space<vmem>>, %arg5: memref<4x3x2xf32, #tpu.memory_space<vmem>>, %arg6: memref<4x3x3xf32, #tpu.memory_space<vmem>>, %arg7: memref<4x3x2xf32, #tpu.memory_space<vmem>>, %arg8: memref<4x1x3xf32, #tpu.memory_space<vmem>>, %arg9: memref<4x2x3xf32, #tpu.memory_space<vmem>>, %arg10: memref<3x3xf32, #tpu.memory_space<vmem>>) attributes {dimension_semantics = [#tpu.dimension_semantics<parallel>, #tpu.dimension_semantics<arbitrary>], iteration_bounds = array<i64: 1, 1>, scalar_prefetch = 0 : i64, scratch_operands = 3 : i64, tpu.core_type = #tpu.core_type<tc>, window_params = [{transform_indices = @transform_0, window_bounds = array<i64: 4, 1, 1>}, {transform_indices = @transform_1, window_bounds = array<i64: 4, 1, 1>}, {transform_indices = @transform_2, window_bounds = array<i64: 4, 3, 2>}, {transform_indices = @transform_3, window_bounds = array<i64: 4, 3, 2>}, {transform_indices = @transform_4, window_bounds = array<i64: 4, 3, 3>}, {transform_indices = @transform_5, window_bounds = array<i64: 4, 3, 2>}]} {
    %c0_i32 = arith.constant 0 : i32
    %0 = arith.cmpi eq, %arg1, %c0_i32 : i32
    %1 = arith.extui %0 : i1 to i32
    %c0_i32_0 = arith.constant 0 : i32
    %2 = arith.cmpi ne, %1, %c0_i32_0 : i32
    scf.if %2 {
      %c0_76 = arith.constant 0 : index
      %c0_77 = arith.constant 0 : index
      %c0_78 = arith.constant 0 : index
      %91 = vector.load %arg5[%c0_76, %c0_77, %c0_78] : memref<4x3x2xf32, #tpu.memory_space<vmem>>, vector<1x3x2xf32>
      %92 = vector.shape_cast %91 : vector<1x3x2xf32> to vector<3x2xf32>
      %c0_79 = arith.constant 0 : index
      %c0_80 = arith.constant 0 : index
      %c0_81 = arith.constant 0 : index
      %93 = vector.load %arg3[%c0_79, %c0_80, %c0_81] : memref<4x1x1xf32, #tpu.memory_space<vmem>>, vector<1x1x1xf32>
      %94 = vector.shape_cast %93 : vector<1x1x1xf32> to vector<1x1xf32>
      %95 = vector.broadcast %94 : vector<1x1xf32> to vector<3x2xf32>
      %96 = arith.mulf %92, %95 : vector<3x2xf32>
      %c0_82 = arith.constant 0 : index
      %c0_83 = arith.constant 0 : index
      %c0_84 = arith.constant 0 : index
      %97 = vector.load %arg6[%c0_82, %c0_83, %c0_84] : memref<4x3x3xf32, #tpu.memory_space<vmem>>, vector<1x3x3xf32>
      %98 = vector.shape_cast %97 : vector<1x3x3xf32> to vector<3x3xf32>
      %cst_85 = arith.constant dense<0.000000e+00> : vector<3xf32>
      %99 = vector.multi_reduction <add>, %98, %cst_85 [0] : vector<3x3xf32> to vector<3xf32>
      %100 = vector.shape_cast %99 : vector<3xf32> to vector<1x3xf32>
      %cst_86 = arith.constant 1.000000e+00 : f32
      %101 = vector.broadcast %cst_86 : f32 to vector<1x3xf32>
      %102 = arith.mulf %101, %100 : vector<1x3xf32>
      %c0_87 = arith.constant 0 : index
      %c0_88 = arith.constant 0 : index
      %c0_89 = arith.constant 0 : index
      %103 = vector.load %arg8[%c0_87, %c0_88, %c0_89] : memref<4x1x3xf32, #tpu.memory_space<vmem>>, vector<1x1x3xf32>
      %104 = vector.shape_cast %103 : vector<1x1x3xf32> to vector<1x3xf32>
      %105 = vector.shape_cast %102 : vector<1x3xf32> to vector<1x1x3xf32>
      tpu.vector_store %arg8[%c0_87, %c0_88, %c0_89], %105 {strides = array<i32>} : memref<4x1x3xf32, #tpu.memory_space<vmem>>, vector<1x1x3xf32>,
      %cst_90 = arith.constant dense<0.000000e+00> : vector<2x3xf32>
      %106 = tpu.matmul %96, %98, %cst_90 {dimension_numbers = #tpu.dot_dimension_numbers<[0], [0], [1], [1], [0, 1, 1, 1], [], []>} : vector<3x2xf32>, vector<3x3xf32>, vector<2x3xf32> -> vector<2x3xf32>
      %cst_91 = arith.constant 1.000000e+00 : f32
      %107 = vector.broadcast %cst_91 : f32 to vector<2x3xf32>
      %108 = arith.mulf %107, %106 : vector<2x3xf32>
      %c0_92 = arith.constant 0 : index
      %c0_93 = arith.constant 0 : index
      %c0_94 = arith.constant 0 : index
      %109 = vector.load %arg9[%c0_92, %c0_93, %c0_94] : memref<4x2x3xf32, #tpu.memory_space<vmem>>, vector<1x2x3xf32>
      %110 = vector.shape_cast %109 : vector<1x2x3xf32> to vector<2x3xf32>
      %111 = vector.shape_cast %108 : vector<2x3xf32> to vector<1x2x3xf32>
      tpu.vector_store %arg9[%c0_92, %c0_93, %c0_94], %111 {strides = array<i32>} : memref<4x2x3xf32, #tpu.memory_space<vmem>>, vector<1x2x3xf32>,
      %c1_95 = arith.constant 1 : index
      %c0_96 = arith.constant 0 : index
      %c0_97 = arith.constant 0 : index
      %112 = vector.load %arg5[%c1_95, %c0_96, %c0_97] : memref<4x3x2xf32, #tpu.memory_space<vmem>>, vector<1x3x2xf32>
      %113 = vector.shape_cast %112 : vector<1x3x2xf32> to vector<3x2xf32>
      %c1_98 = arith.constant 1 : index
      %c0_99 = arith.constant 0 : index
      %c0_100 = arith.constant 0 : index
      %114 = vector.load %arg3[%c1_98, %c0_99, %c0_100] : memref<4x1x1xf32, #tpu.memory_space<vmem>>, vector<1x1x1xf32>
      %115 = vector.shape_cast %114 : vector<1x1x1xf32> to vector<1x1xf32>
      %116 = vector.broadcast %115 : vector<1x1xf32> to vector<3x2xf32>
      %117 = arith.mulf %113, %116 : vector<3x2xf32>
      %c1_101 = arith.constant 1 : index
      %c0_102 = arith.constant 0 : index
      %c0_103 = arith.constant 0 : index
      %118 = vector.load %arg6[%c1_101, %c0_102, %c0_103] : memref<4x3x3xf32, #tpu.memory_space<vmem>>, vector<1x3x3xf32>
      %119 = vector.shape_cast %118 : vector<1x3x3xf32> to vector<3x3xf32>
      %cst_104 = arith.constant dense<0.000000e+00> : vector<3xf32>
      %120 = vector.multi_reduction <add>, %119, %cst_104 [0] : vector<3x3xf32> to vector<3xf32>
      %121 = vector.shape_cast %120 : vector<3xf32> to vector<1x3xf32>
      %cst_105 = arith.constant 1.000000e+00 : f32
      %122 = vector.broadcast %cst_105 : f32 to vector<1x3xf32>
      %123 = arith.mulf %122, %121 : vector<1x3xf32>
      %c1_106 = arith.constant 1 : index
      %c0_107 = arith.constant 0 : index
      %c0_108 = arith.constant 0 : index
      %124 = vector.load %arg8[%c1_106, %c0_107, %c0_108] : memref<4x1x3xf32, #tpu.memory_space<vmem>>, vector<1x1x3xf32>
      %125 = vector.shape_cast %124 : vector<1x1x3xf32> to vector<1x3xf32>
      %126 = vector.shape_cast %123 : vector<1x3xf32> to vector<1x1x3xf32>
      tpu.vector_store %arg8[%c1_106, %c0_107, %c0_108], %126 {strides = array<i32>} : memref<4x1x3xf32, #tpu.memory_space<vmem>>, vector<1x1x3xf32>,
      %cst_109 = arith.constant dense<0.000000e+00> : vector<2x3xf32>
      %127 = tpu.matmul %117, %119, %cst_109 {dimension_numbers = #tpu.dot_dimension_numbers<[0], [0], [1], [1], [0, 1, 1, 1], [], []>} : vector<3x2xf32>, vector<3x3xf32>, vector<2x3xf32> -> vector<2x3xf32>
      %cst_110 = arith.constant 1.000000e+00 : f32
      %128 = vector.broadcast %cst_110 : f32 to vector<2x3xf32>
      %129 = arith.mulf %128, %127 : vector<2x3xf32>
      %c1_111 = arith.constant 1 : index
      %c0_112 = arith.constant 0 : index
      %c0_113 = arith.constant 0 : index
      %130 = vector.load %arg9[%c1_111, %c0_112, %c0_113] : memref<4x2x3xf32, #tpu.memory_space<vmem>>, vector<1x2x3xf32>
      %131 = vector.shape_cast %130 : vector<1x2x3xf32> to vector<2x3xf32>
      %132 = vector.shape_cast %129 : vector<2x3xf32> to vector<1x2x3xf32>
      tpu.vector_store %arg9[%c1_111, %c0_112, %c0_113], %132 {strides = array<i32>} : memref<4x2x3xf32, #tpu.memory_space<vmem>>, vector<1x2x3xf32>,
      %c2_114 = arith.constant 2 : index
      %c0_115 = arith.constant 0 : index
      %c0_116 = arith.constant 0 : index
      %133 = vector.load %arg5[%c2_114, %c0_115, %c0_116] : memref<4x3x2xf32, #tpu.memory_space<vmem>>, vector<1x3x2xf32>
      %134 = vector.shape_cast %133 : vector<1x3x2xf32> to vector<3x2xf32>
      %c2_117 = arith.constant 2 : index
      %c0_118 = arith.constant 0 : index
      %c0_119 = arith.constant 0 : index
      %135 = vector.load %arg3[%c2_117, %c0_118, %c0_119] : memref<4x1x1xf32, #tpu.memory_space<vmem>>, vector<1x1x1xf32>
      %136 = vector.shape_cast %135 : vector<1x1x1xf32> to vector<1x1xf32>
      %137 = vector.broadcast %136 : vector<1x1xf32> to vector<3x2xf32>
      %138 = arith.mulf %134, %137 : vector<3x2xf32>
      %c2_120 = arith.constant 2 : index
      %c0_121 = arith.constant 0 : index
      %c0_122 = arith.constant 0 : index
      %139 = vector.load %arg6[%c2_120, %c0_121, %c0_122] : memref<4x3x3xf32, #tpu.memory_space<vmem>>, vector<1x3x3xf32>
      %140 = vector.shape_cast %139 : vector<1x3x3xf32> to vector<3x3xf32>
      %cst_123 = arith.constant dense<0.000000e+00> : vector<3xf32>
      %141 = vector.multi_reduction <add>, %140, %cst_123 [0] : vector<3x3xf32> to vector<3xf32>
      %142 = vector.shape_cast %141 : vector<3xf32> to vector<1x3xf32>
      %cst_124 = arith.constant 1.000000e+00 : f32
      %143 = vector.broadcast %cst_124 : f32 to vector<1x3xf32>
      %144 = arith.mulf %143, %142 : vector<1x3xf32>
      %c2_125 = arith.constant 2 : index
      %c0_126 = arith.constant 0 : index
      %c0_127 = arith.constant 0 : index
      %145 = vector.load %arg8[%c2_125, %c0_126, %c0_127] : memref<4x1x3xf32, #tpu.memory_space<vmem>>, vector<1x1x3xf32>
      %146 = vector.shape_cast %145 : vector<1x1x3xf32> to vector<1x3xf32>
      %147 = vector.shape_cast %144 : vector<1x3xf32> to vector<1x1x3xf32>
      tpu.vector_store %arg8[%c2_125, %c0_126, %c0_127], %147 {strides = array<i32>} : memref<4x1x3xf32, #tpu.memory_space<vmem>>, vector<1x1x3xf32>,
      %cst_128 = arith.constant dense<0.000000e+00> : vector<2x3xf32>
      %148 = tpu.matmul %138, %140, %cst_128 {dimension_numbers = #tpu.dot_dimension_numbers<[0], [0], [1], [1], [0, 1, 1, 1], [], []>} : vector<3x2xf32>, vector<3x3xf32>, vector<2x3xf32> -> vector<2x3xf32>
      %cst_129 = arith.constant 1.000000e+00 : f32
      %149 = vector.broadcast %cst_129 : f32 to vector<2x3xf32>
      %150 = arith.mulf %149, %148 : vector<2x3xf32>
      %c2_130 = arith.constant 2 : index
      %c0_131 = arith.constant 0 : index
      %c0_132 = arith.constant 0 : index
      %151 = vector.load %arg9[%c2_130, %c0_131, %c0_132] : memref<4x2x3xf32, #tpu.memory_space<vmem>>, vector<1x2x3xf32>
      %152 = vector.shape_cast %151 : vector<1x2x3xf32> to vector<2x3xf32>
      %153 = vector.shape_cast %150 : vector<2x3xf32> to vector<1x2x3xf32>
      tpu.vector_store %arg9[%c2_130, %c0_131, %c0_132], %153 {strides = array<i32>} : memref<4x2x3xf32, #tpu.memory_space<vmem>>, vector<1x2x3xf32>,
      %c3_133 = arith.constant 3 : index
      %c0_134 = arith.constant 0 : index
      %c0_135 = arith.constant 0 : index
      %154 = vector.load %arg5[%c3_133, %c0_134, %c0_135] : memref<4x3x2xf32, #tpu.memory_space<vmem>>, vector<1x3x2xf32>
      %155 = vector.shape_cast %154 : vector<1x3x2xf32> to vector<3x2xf32>
      %c3_136 = arith.constant 3 : index
      %c0_137 = arith.constant 0 : index
      %c0_138 = arith.constant 0 : index
      %156 = vector.load %arg3[%c3_136, %c0_137, %c0_138] : memref<4x1x1xf32, #tpu.memory_space<vmem>>, vector<1x1x1xf32>
      %157 = vector.shape_cast %156 : vector<1x1x1xf32> to vector<1x1xf32>
      %158 = vector.broadcast %157 : vector<1x1xf32> to vector<3x2xf32>
      %159 = arith.mulf %155, %158 : vector<3x2xf32>
      %c3_139 = arith.constant 3 : index
      %c0_140 = arith.constant 0 : index
      %c0_141 = arith.constant 0 : index
      %160 = vector.load %arg6[%c3_139, %c0_140, %c0_141] : memref<4x3x3xf32, #tpu.memory_space<vmem>>, vector<1x3x3xf32>
      %161 = vector.shape_cast %160 : vector<1x3x3xf32> to vector<3x3xf32>
      %cst_142 = arith.constant dense<0.000000e+00> : vector<3xf32>
      %162 = vector.multi_reduction <add>, %161, %cst_142 [0] : vector<3x3xf32> to vector<3xf32>
      %163 = vector.shape_cast %162 : vector<3xf32> to vector<1x3xf32>
      %cst_143 = arith.constant 1.000000e+00 : f32
      %164 = vector.broadcast %cst_143 : f32 to vector<1x3xf32>
      %165 = arith.mulf %164, %163 : vector<1x3xf32>
      %c3_144 = arith.constant 3 : index
      %c0_145 = arith.constant 0 : index
      %c0_146 = arith.constant 0 : index
      %166 = vector.load %arg8[%c3_144, %c0_145, %c0_146] : memref<4x1x3xf32, #tpu.memory_space<vmem>>, vector<1x1x3xf32>
      %167 = vector.shape_cast %166 : vector<1x1x3xf32> to vector<1x3xf32>
      %168 = vector.shape_cast %165 : vector<1x3xf32> to vector<1x1x3xf32>
      tpu.vector_store %arg8[%c3_144, %c0_145, %c0_146], %168 {strides = array<i32>} : memref<4x1x3xf32, #tpu.memory_space<vmem>>, vector<1x1x3xf32>,
      %cst_147 = arith.constant dense<0.000000e+00> : vector<2x3xf32>
      %169 = tpu.matmul %159, %161, %cst_147 {dimension_numbers = #tpu.dot_dimension_numbers<[0], [0], [1], [1], [0, 1, 1, 1], [], []>} : vector<3x2xf32>, vector<3x3xf32>, vector<2x3xf32> -> vector<2x3xf32>
      %cst_148 = arith.constant 1.000000e+00 : f32
      %170 = vector.broadcast %cst_148 : f32 to vector<2x3xf32>
      %171 = arith.mulf %170, %169 : vector<2x3xf32>
      %c3_149 = arith.constant 3 : index
      %c0_150 = arith.constant 0 : index
      %c0_151 = arith.constant 0 : index
      %172 = vector.load %arg9[%c3_149, %c0_150, %c0_151] : memref<4x2x3xf32, #tpu.memory_space<vmem>>, vector<1x2x3xf32>
      %173 = vector.shape_cast %172 : vector<1x2x3xf32> to vector<2x3xf32>
      %174 = vector.shape_cast %171 : vector<2x3xf32> to vector<1x2x3xf32>
      tpu.vector_store %arg9[%c3_149, %c0_150, %c0_151], %174 {strides = array<i32>} : memref<4x2x3xf32, #tpu.memory_space<vmem>>, vector<1x2x3xf32>,
    } else {
    }
    %c0 = arith.constant 0 : index
    %c0_1 = arith.constant 0 : index
    %c0_2 = arith.constant 0 : index
    %3 = vector.load %arg4[%c0, %c0_1, %c0_2] : memref<4x3x2xf32, #tpu.memory_space<vmem>>, vector<1x3x2xf32>
    %4 = vector.shape_cast %3 : vector<1x3x2xf32> to vector<3x2xf32>
    %c0_3 = arith.constant 0 : index
    %c0_4 = arith.constant 0 : index
    %c0_5 = arith.constant 0 : index
    %5 = vector.load %arg2[%c0_3, %c0_4, %c0_5] : memref<4x1x1xf32, #tpu.memory_space<vmem>>, vector<1x1x1xf32>
    %6 = vector.shape_cast %5 : vector<1x1x1xf32> to vector<1x1xf32>
    %7 = vector.broadcast %6 : vector<1x1xf32> to vector<3x2xf32>
    %8 = arith.mulf %4, %7 : vector<3x2xf32>
    %c0_6 = arith.constant 0 : index
    %c0_7 = arith.constant 0 : index
    %c0_8 = arith.constant 0 : index
    %9 = vector.load %arg8[%c0_6, %c0_7, %c0_8] : memref<4x1x3xf32, #tpu.memory_space<vmem>>, vector<1x1x3xf32>
    %10 = vector.shape_cast %9 : vector<1x1x3xf32> to vector<1x3xf32>
    %c0_9 = arith.constant 0 : index
    %c0_10 = arith.constant 0 : index
    %c0_11 = arith.constant 0 : index
    %11 = vector.load %arg9[%c0_9, %c0_10, %c0_11] : memref<4x2x3xf32, #tpu.memory_space<vmem>>, vector<1x2x3xf32>
    %12 = vector.shape_cast %11 : vector<1x2x3xf32> to vector<2x3xf32>
    %cst = arith.constant dense<0.000000e+00> : vector<3x3xf32>
    %13 = tpu.matmul %8, %12, %cst {dimension_numbers = #tpu.dot_dimension_numbers<[1], [0], [0], [1], [0, 0, 1, 1], [], []>} : vector<3x2xf32>, vector<2x3xf32>, vector<3x3xf32> -> vector<3x3xf32>
    %14 = vector.broadcast %10 : vector<1x3xf32> to vector<3x3xf32>
    %15 = arith.addf %14, %13 : vector<3x3xf32>
    %c0_12 = arith.constant 0 : index
    %c0_13 = arith.constant 0 : index
    %16 = vector.load %arg10[%c0_12, %c0_13] : memref<3x3xf32, #tpu.memory_space<vmem>>, vector<3x3xf32>
    tpu.vector_store %arg10[%c0_12, %c0_13], %15 {strides = array<i32>} : memref<3x3xf32, #tpu.memory_space<vmem>>, vector<3x3xf32>,
    %c0_14 = arith.constant 0 : index
    %c0_15 = arith.constant 0 : index
    %17 = vector.load %arg10[%c0_14, %c0_15] : memref<3x3xf32, #tpu.memory_space<vmem>>, vector<3x3xf32>
    %18 = vector.extract_strided_slice %17 {offsets = [0, 0], sizes = [3, 2], strides = [1, 1]} : vector<3x3xf32> to vector<3x2xf32>
    %19 = vector.extract_strided_slice %17 {offsets = [0, 2], sizes = [3, 1], strides = [1, 1]} : vector<3x3xf32> to vector<3x1xf32>
    %20 = vector.broadcast %19 : vector<3x1xf32> to vector<3x2xf32>
    %21 = arith.divf %18, %20 : vector<3x2xf32>
    %c0_16 = arith.constant 0 : index
    %c0_17 = arith.constant 0 : index
    %c0_18 = arith.constant 0 : index
    %22 = vector.load %arg7[%c0_16, %c0_17, %c0_18] : memref<4x3x2xf32, #tpu.memory_space<vmem>>, vector<1x3x2xf32>
    %23 = vector.shape_cast %22 : vector<1x3x2xf32> to vector<3x2xf32>
    %24 = vector.shape_cast %21 : vector<3x2xf32> to vector<1x3x2xf32>
    tpu.vector_store %arg7[%c0_16, %c0_17, %c0_18], %24 {strides = array<i32>} : memref<4x3x2xf32, #tpu.memory_space<vmem>>, vector<1x3x2xf32>,
    %c1 = arith.constant 1 : index
    %c0_19 = arith.constant 0 : index
    %c0_20 = arith.constant 0 : index
    %25 = vector.load %arg4[%c1, %c0_19, %c0_20] : memref<4x3x2xf32, #tpu.memory_space<vmem>>, vector<1x3x2xf32>
    %26 = vector.shape_cast %25 : vector<1x3x2xf32> to vector<3x2xf32>
    %c1_21 = arith.constant 1 : index
    %c0_22 = arith.constant 0 : index
    %c0_23 = arith.constant 0 : index
    %27 = vector.load %arg2[%c1_21, %c0_22, %c0_23] : memref<4x1x1xf32, #tpu.memory_space<vmem>>, vector<1x1x1xf32>
    %28 = vector.shape_cast %27 : vector<1x1x1xf32> to vector<1x1xf32>
    %29 = vector.broadcast %28 : vector<1x1xf32> to vector<3x2xf32>
    %30 = arith.mulf %26, %29 : vector<3x2xf32>
    %c1_24 = arith.constant 1 : index
    %c0_25 = arith.constant 0 : index
    %c0_26 = arith.constant 0 : index
    %31 = vector.load %arg8[%c1_24, %c0_25, %c0_26] : memref<4x1x3xf32, #tpu.memory_space<vmem>>, vector<1x1x3xf32>
    %32 = vector.shape_cast %31 : vector<1x1x3xf32> to vector<1x3xf32>
    %c1_27 = arith.constant 1 : index
    %c0_28 = arith.constant 0 : index
    %c0_29 = arith.constant 0 : index
    %33 = vector.load %arg9[%c1_27, %c0_28, %c0_29] : memref<4x2x3xf32, #tpu.memory_space<vmem>>, vector<1x2x3xf32>
    %34 = vector.shape_cast %33 : vector<1x2x3xf32> to vector<2x3xf32>
    %cst_30 = arith.constant dense<0.000000e+00> : vector<3x3xf32>
    %35 = tpu.matmul %30, %34, %cst_30 {dimension_numbers = #tpu.dot_dimension_numbers<[1], [0], [0], [1], [0, 0, 1, 1], [], []>} : vector<3x2xf32>, vector<2x3xf32>, vector<3x3xf32> -> vector<3x3xf32>
    %36 = vector.broadcast %32 : vector<1x3xf32> to vector<3x3xf32>
    %37 = arith.addf %36, %35 : vector<3x3xf32>
    %c0_31 = arith.constant 0 : index
    %c0_32 = arith.constant 0 : index
    %38 = vector.load %arg10[%c0_31, %c0_32] : memref<3x3xf32, #tpu.memory_space<vmem>>, vector<3x3xf32>
    tpu.vector_store %arg10[%c0_31, %c0_32], %37 {strides = array<i32>} : memref<3x3xf32, #tpu.memory_space<vmem>>, vector<3x3xf32>,
    %c0_33 = arith.constant 0 : index
    %c0_34 = arith.constant 0 : index
    %39 = vector.load %arg10[%c0_33, %c0_34] : memref<3x3xf32, #tpu.memory_space<vmem>>, vector<3x3xf32>
    %40 = vector.extract_strided_slice %39 {offsets = [0, 0], sizes = [3, 2], strides = [1, 1]} : vector<3x3xf32> to vector<3x2xf32>
    %41 = vector.extract_strided_slice %39 {offsets = [0, 2], sizes = [3, 1], strides = [1, 1]} : vector<3x3xf32> to vector<3x1xf32>
    %42 = vector.broadcast %41 : vector<3x1xf32> to vector<3x2xf32>
    %43 = arith.divf %40, %42 : vector<3x2xf32>
    %c1_35 = arith.constant 1 : index
    %c0_36 = arith.constant 0 : index
    %c0_37 = arith.constant 0 : index
    %44 = vector.load %arg7[%c1_35, %c0_36, %c0_37] : memref<4x3x2xf32, #tpu.memory_space<vmem>>, vector<1x3x2xf32>
    %45 = vector.shape_cast %44 : vector<1x3x2xf32> to vector<3x2xf32>
    %46 = vector.shape_cast %43 : vector<3x2xf32> to vector<1x3x2xf32>
    tpu.vector_store %arg7[%c1_35, %c0_36, %c0_37], %46 {strides = array<i32>} : memref<4x3x2xf32, #tpu.memory_space<vmem>>, vector<1x3x2xf32>,
    %c2 = arith.constant 2 : index
    %c0_38 = arith.constant 0 : index
    %c0_39 = arith.constant 0 : index
    %47 = vector.load %arg4[%c2, %c0_38, %c0_39] : memref<4x3x2xf32, #tpu.memory_space<vmem>>, vector<1x3x2xf32>
    %48 = vector.shape_cast %47 : vector<1x3x2xf32> to vector<3x2xf32>
    %c2_40 = arith.constant 2 : index
    %c0_41 = arith.constant 0 : index
    %c0_42 = arith.constant 0 : index
    %49 = vector.load %arg2[%c2_40, %c0_41, %c0_42] : memref<4x1x1xf32, #tpu.memory_space<vmem>>, vector<1x1x1xf32>
    %50 = vector.shape_cast %49 : vector<1x1x1xf32> to vector<1x1xf32>
    %51 = vector.broadcast %50 : vector<1x1xf32> to vector<3x2xf32>
    %52 = arith.mulf %48, %51 : vector<3x2xf32>
    %c2_43 = arith.constant 2 : index
    %c0_44 = arith.constant 0 : index
    %c0_45 = arith.constant 0 : index
    %53 = vector.load %arg8[%c2_43, %c0_44, %c0_45] : memref<4x1x3xf32, #tpu.memory_space<vmem>>, vector<1x1x3xf32>
    %54 = vector.shape_cast %53 : vector<1x1x3xf32> to vector<1x3xf32>
    %c2_46 = arith.constant 2 : index
    %c0_47 = arith.constant 0 : index
    %c0_48 = arith.constant 0 : index
    %55 = vector.load %arg9[%c2_46, %c0_47, %c0_48] : memref<4x2x3xf32, #tpu.memory_space<vmem>>, vector<1x2x3xf32>
    %56 = vector.shape_cast %55 : vector<1x2x3xf32> to vector<2x3xf32>
    %cst_49 = arith.constant dense<0.000000e+00> : vector<3x3xf32>
    %57 = tpu.matmul %52, %56, %cst_49 {dimension_numbers = #tpu.dot_dimension_numbers<[1], [0], [0], [1], [0, 0, 1, 1], [], []>} : vector<3x2xf32>, vector<2x3xf32>, vector<3x3xf32> -> vector<3x3xf32>
    %58 = vector.broadcast %54 : vector<1x3xf32> to vector<3x3xf32>
    %59 = arith.addf %58, %57 : vector<3x3xf32>
    %c0_50 = arith.constant 0 : index
    %c0_51 = arith.constant 0 : index
    %60 = vector.load %arg10[%c0_50, %c0_51] : memref<3x3xf32, #tpu.memory_space<vmem>>, vector<3x3xf32>
    tpu.vector_store %arg10[%c0_50, %c0_51], %59 {strides = array<i32>} : memref<3x3xf32, #tpu.memory_space<vmem>>, vector<3x3xf32>,
    %c0_52 = arith.constant 0 : index
    %c0_53 = arith.constant 0 : index
    %61 = vector.load %arg10[%c0_52, %c0_53] : memref<3x3xf32, #tpu.memory_space<vmem>>, vector<3x3xf32>
    %62 = vector.extract_strided_slice %61 {offsets = [0, 0], sizes = [3, 2], strides = [1, 1]} : vector<3x3xf32> to vector<3x2xf32>
    %63 = vector.extract_strided_slice %61 {offsets = [0, 2], sizes = [3, 1], strides = [1, 1]} : vector<3x3xf32> to vector<3x1xf32>
    %64 = vector.broadcast %63 : vector<3x1xf32> to vector<3x2xf32>
    %65 = arith.divf %62, %64 : vector<3x2xf32>
    %c2_54 = arith.constant 2 : index
    %c0_55 = arith.constant 0 : index
    %c0_56 = arith.constant 0 : index
    %66 = vector.load %arg7[%c2_54, %c0_55, %c0_56] : memref<4x3x2xf32, #tpu.memory_space<vmem>>, vector<1x3x2xf32>
    %67 = vector.shape_cast %66 : vector<1x3x2xf32> to vector<3x2xf32>
    %68 = vector.shape_cast %65 : vector<3x2xf32> to vector<1x3x2xf32>
    tpu.vector_store %arg7[%c2_54, %c0_55, %c0_56], %68 {strides = array<i32>} : memref<4x3x2xf32, #tpu.memory_space<vmem>>, vector<1x3x2xf32>,
    %c3 = arith.constant 3 : index
    %c0_57 = arith.constant 0 : index
    %c0_58 = arith.constant 0 : index
    %69 = vector.load %arg4[%c3, %c0_57, %c0_58] : memref<4x3x2xf32, #tpu.memory_space<vmem>>, vector<1x3x2xf32>
    %70 = vector.shape_cast %69 : vector<1x3x2xf32> to vector<3x2xf32>
    %c3_59 = arith.constant 3 : index
    %c0_60 = arith.constant 0 : index
    %c0_61 = arith.constant 0 : index
    %71 = vector.load %arg2[%c3_59, %c0_60, %c0_61] : memref<4x1x1xf32, #tpu.memory_space<vmem>>, vector<1x1x1xf32>
    %72 = vector.shape_cast %71 : vector<1x1x1xf32> to vector<1x1xf32>
    %73 = vector.broadcast %72 : vector<1x1xf32> to vector<3x2xf32>
    %74 = arith.mulf %70, %73 : vector<3x2xf32>
    %c3_62 = arith.constant 3 : index
    %c0_63 = arith.constant 0 : index
    %c0_64 = arith.constant 0 : index
    %75 = vector.load %arg8[%c3_62, %c0_63, %c0_64] : memref<4x1x3xf32, #tpu.memory_space<vmem>>, vector<1x1x3xf32>
    %76 = vector.shape_cast %75 : vector<1x1x3xf32> to vector<1x3xf32>
    %c3_65 = arith.constant 3 : index
    %c0_66 = arith.constant 0 : index
    %c0_67 = arith.constant 0 : index
    %77 = vector.load %arg9[%c3_65, %c0_66, %c0_67] : memref<4x2x3xf32, #tpu.memory_space<vmem>>, vector<1x2x3xf32>
    %78 = vector.shape_cast %77 : vector<1x2x3xf32> to vector<2x3xf32>
    %cst_68 = arith.constant dense<0.000000e+00> : vector<3x3xf32>
    %79 = tpu.matmul %74, %78, %cst_68 {dimension_numbers = #tpu.dot_dimension_numbers<[1], [0], [0], [1], [0, 0, 1, 1], [], []>} : vector<3x2xf32>, vector<2x3xf32>, vector<3x3xf32> -> vector<3x3xf32>
    %80 = vector.broadcast %76 : vector<1x3xf32> to vector<3x3xf32>
    %81 = arith.addf %80, %79 : vector<3x3xf32>
    %c0_69 = arith.constant 0 : index
    %c0_70 = arith.constant 0 : index
    %82 = vector.load %arg10[%c0_69, %c0_70] : memref<3x3xf32, #tpu.memory_space<vmem>>, vector<3x3xf32>
    tpu.vector_store %arg10[%c0_69, %c0_70], %81 {strides = array<i32>} : memref<3x3xf32, #tpu.memory_space<vmem>>, vector<3x3xf32>,
    %c0_71 = arith.constant 0 : index
    %c0_72 = arith.constant 0 : index
    %83 = vector.load %arg10[%c0_71, %c0_72] : memref<3x3xf32, #tpu.memory_space<vmem>>, vector<3x3xf32>
    %84 = vector.extract_strided_slice %83 {offsets = [0, 0], sizes = [3, 2], strides = [1, 1]} : vector<3x3xf32> to vector<3x2xf32>
    %85 = vector.extract_strided_slice %83 {offsets = [0, 2], sizes = [3, 1], strides = [1, 1]} : vector<3x3xf32> to vector<3x1xf32>
    %86 = vector.broadcast %85 : vector<3x1xf32> to vector<3x2xf32>
    %87 = arith.divf %84, %86 : vector<3x2xf32>
    %c3_73 = arith.constant 3 : index
    %c0_74 = arith.constant 0 : index
    %c0_75 = arith.constant 0 : index
    %88 = vector.load %arg7[%c3_73, %c0_74, %c0_75] : memref<4x3x2xf32, #tpu.memory_space<vmem>>, vector<1x3x2xf32>
    %89 = vector.shape_cast %88 : vector<1x3x2xf32> to vector<3x2xf32>
    %90 = vector.shape_cast %87 : vector<3x2xf32> to vector<1x3x2xf32>
    tpu.vector_store %arg7[%c3_73, %c0_74, %c0_75], %90 {strides = array<i32>} : memref<4x3x2xf32, #tpu.memory_space<vmem>>, vector<1x3x2xf32>,
    return
  }
  func.func @transform_0(%arg0: i32, %arg1: i32) -> (i32, i32, i32) {
    %c0_i32 = arith.constant 0 : i32
    %c0_i32_0 = arith.constant 0 : i32
    %c0_i32_1 = arith.constant 0 : i32
    return %arg0, %c0_i32, %c0_i32_0 : i32, i32, i32
  }
  func.func @transform_1(%arg0: i32, %arg1: i32) -> (i32, i32, i32) {
    %c0_i32 = arith.constant 0 : i32
    %c0_i32_0 = arith.constant 0 : i32
    %c0_i32_1 = arith.constant 0 : i32
    return %arg0, %c0_i32, %c0_i32_0 : i32, i32, i32
  }
  func.func @transform_2(%arg0: i32, %arg1: i32) -> (i32, i32, i32) {
    %c0_i32 = arith.constant 0 : i32
    %c0_i32_0 = arith.constant 0 : i32
    return %arg0, %arg1, %c0_i32 : i32, i32, i32
  }
  func.func @transform_3(%arg0: i32, %arg1: i32) -> (i32, i32, i32) {
    %c0_i32 = arith.constant 0 : i32
    %c0_i32_0 = arith.constant 0 : i32
    %c0_i32_1 = arith.constant 0 : i32
    return %arg0, %c0_i32, %c0_i32_0 : i32, i32, i32
  }
  func.func @transform_4(%arg0: i32, %arg1: i32) -> (i32, i32, i32) {
    %c0_i32 = arith.constant 0 : i32
    %c0_i32_0 = arith.constant 0 : i32
    %c0_i32_1 = arith.constant 0 : i32
    return %arg0, %c0_i32, %c0_i32_0 : i32, i32, i32
  }
  func.func @transform_5(%arg0: i32, %arg1: i32) -> (i32, i32, i32) {
    %c0_i32 = arith.constant 0 : i32
    %c0_i32_0 = arith.constant 0 : i32
    return %arg0, %arg1, %c0_i32 : i32, i32, i32
  }
}

</mosaic_0001>

<llo_original>
// kernel: tpu_custom_call.1
$region0: #{tpu_custom_call.1}
  #allocation0 [shape = 'u32[]', space=smem, size = 0x4, offset = 0x4, fixed_abs, tag = 'smem constant byte address 0x4 - core index']
  #allocation1 [shape = 'u32[72,128]{1,0:T(1,128)}', space=vmem, size = 0x9000, scoped, tag = 'internal scratch']
  #allocation2 [shape = 'f32[4,1,3]{2,1,0:T(1,128)}', space=vmem, size = 0x800, scoped, tag = 'scratch operand']
  #allocation3 [shape = 'f32[4,2,3]{2,1,0:T(2,128)}', space=vmem, size = 0x1000, scoped, tag = 'scratch operand']
  #allocation4 [shape = 'f32[3,3]{1,0:T(4,128)}', space=vmem, size = 0x800, scoped, tag = 'scratch operand']
  %s0 = inlined_call_operand.vmem [shape: f32[4,1,1], index: 0, kind: input, shape index: {}]
  %s1 = inlined_call_operand.vmem [shape: f32[4,1,1], index: 1, kind: input, shape index: {}]
  %s2 = inlined_call_operand.vmem [shape: f32[4,3,2], index: 2, kind: input, shape index: {}]
  %s3 = inlined_call_operand.vmem [shape: f32[4,3,2], index: 3, kind: input, shape index: {}]
  %s4 = inlined_call_operand.vmem [shape: f32[4,3,3], index: 4, kind: input, shape index: {}]
  %s5 = inlined_call_operand.vmem [shape: f32[4,3,2], index: 5, kind: output, shape index: {}]
  %s6 = sld [smem:[#allocation0]]
  $region34: #{tpu_custom_call.1} parent=0
    _
  %s8 = ssub.s32 1, %s6
  %s9 = scalar_select 0, %s8, %s6
  // Predicated region
  $region2: #{tpu_custom_call.1} parent=0 // pred_check
    _
  $region3: #{tpu_custom_call.1} parent=0 // pred_check_branch
    %11 = sbr.rel (0) target = $region5
  $region4: #{tpu_custom_call.1} parent=0 // pred_region
    _
  $region5: #{tpu_custom_call.1} parent=0 // pred_fallthru
    _
  // Predicated region
  $region6: #{tpu_custom_call.1} parent=0 // pred_check
    _
  $region7: #{tpu_custom_call.1} parent=0 // pred_check_branch
    %13 = sbr.rel (0) target = $region9
  $region8: #{tpu_custom_call.1} parent=0 // pred_region
    _
  $region9: #{tpu_custom_call.1} parent=0 // pred_fallthru
    _
  // Predicated region
  $region10: #{tpu_custom_call.1} parent=0 // pred_check
    _
  $region11: #{tpu_custom_call.1} parent=0 // pred_check_branch
    %15 = sbr.rel (0) target = $region13
  $region12: #{tpu_custom_call.1} parent=0 // pred_region
    _
  $region13: #{tpu_custom_call.1} parent=0 // pred_fallthru
    _
  // Predicated region
  $region14: #{tpu_custom_call.1} parent=0 // pred_check
    _
  $region15: #{tpu_custom_call.1} parent=0 // pred_check_branch
    %17 = sbr.rel (0) target = $region17
  $region16: #{tpu_custom_call.1} parent=0 // pred_region
    _
  $region17: #{tpu_custom_call.1} parent=0 // pred_fallthru
    _
  // Predicated region
  $region18: #{tpu_custom_call.1} parent=0 // pred_check
    _
  $region19: #{tpu_custom_call.1} parent=0 // pred_check_branch
    %19 = sbr.rel (0) target = $region21
  $region20: #{tpu_custom_call.1} parent=0 // pred_region
    _
  $region21: #{tpu_custom_call.1} parent=0 // pred_fallthru
    _
  %p20 = scmp.eq.s32.totalorder 0, 0
  // Predicated region
  $region22: #{tpu_custom_call.1} parent=0 // pred_check
    %p21 = pneg %p20
  $region23: #{tpu_custom_call.1} parent=0 // pred_check_branch
    %23 = sbr.rel (%p21) target = $region25
  $region24: #{tpu_custom_call.1} parent=0 // pred_region
    %v24 = vld [vmem:[%s3] sm:$0x7]
    %v25 = vld [vmem:[%s1] sm:$0x1]
    %v27 = vperm.slane %v25, 0
    %28 = vset.pattern.permute.xlu0 0
    %29 = vperm.xlu0 %28, %v27
    %v30 = vpop.permute.xlu0 %29
    %v32 = vmul.f32 %v24, %v30
    %v33 = vld [vmem:[%s4] sm:$0x7]
    %vm34 = vcmask 18432
    %v35 = vsel %vm34, %v33, 0.0
    %v36 = vrot.slane %v35, 4
    %v37 = vadd.f32 %v35, %v36
    %v38 = vrot.slane %v37, 2
    %v39 = vadd.f32 %v37, %v38
    %v40 = vrot.slane %v39, 1
    %v41 = vadd.f32 %v39, %v40
    %vm42 = vcmask 16384
    %43 = vst.msk [vmem:[#allocation2] sm:$0x1] %vm42, %v41
    %44 = vxpose.xlu0.b32.start [1/16] %v32, 128
    %45 = vxpose.xlu0.b32.cont [2/16] 0.0, 128
    %46 = vxpose.xlu0.b32.cont [3/16] 0.0, 128
    %47 = vxpose.xlu0.b32.cont [4/16] 0.0, 128
    %48 = vxpose.xlu0.b32.cont [5/16] 0.0, 128
    %49 = vxpose.xlu0.b32.cont [6/16] 0.0, 128
    %50 = vxpose.xlu0.b32.cont [7/16] 0.0, 128
    %51 = vxpose.xlu0.b32.cont [8/16] 0.0, 128
    %52 = vxpose.xlu0.b32.cont [9/16] 0.0, 128
    %53 = vxpose.xlu0.b32.cont [10/16] 0.0, 128
    %54 = vxpose.xlu0.b32.cont [11/16] 0.0, 128
    %55 = vxpose.xlu0.b32.cont [12/16] 0.0, 128
    %56 = vxpose.xlu0.b32.cont [13/16] 0.0, 128
    %57 = vxpose.xlu0.b32.cont [14/16] 0.0, 128
    %58 = vxpose.xlu0.b32.cont [15/16] 0.0, 128
    %59 = vxpose.xlu0.b32.end [16/16] 0.0, 128
    %v60 = vpop.trf.xlu0
    %v61 = vpop.trf.xlu0
    %v62 = vpop.trf.xlu0
    %v63 = vpop.trf.xlu0
    %v64 = vpop.trf.xlu0
    %v65 = vpop.trf.xlu0
    %v66 = vpop.trf.xlu0
    %v67 = vpop.trf.xlu0
    %v68 = vpop.trf.xlu0
    %v69 = vpop.trf.xlu0
    %v70 = vpop.trf.xlu0
    %v71 = vpop.trf.xlu0
    %v72 = vpop.trf.xlu0
    %v73 = vpop.trf.xlu0
    %v74 = vpop.trf.xlu0
    %v75 = vpop.trf.xlu0
    %vm76 = vcmask 23552
    %v78 = vsel %vm76, %v60, 0
    %vm80 = vcmask 1042432
    %v82 = vsel %vm80, %v33, 0
    %84 = vmatpush.msra.mxu0 0.0
    %85 = vmatpush.msra.mxu0 0.0
    %86 = vmatpush.msra.mxu0 0.0
    %87 = vmatpush.msra.mxu0 0.0
    %88 = vmatpush.msra.mxu0 0.0
    %89 = vmatpush.msra.mxu0 0.0
    %90 = vmatpush.msra.mxu0 0.0
    %91 = vmatpush.msra.mxu0 0.0
    %92 = vmatpush.msra.mxu0 0.0
    %93 = vmatpush.msra.mxu0 0.0
    %94 = vmatpush.msra.mxu0 0.0
    %95 = vmatpush.msra.mxu0 0.0
    %96 = vmatpush.msra.mxu0 0.0
    %97 = vmatpush.msra.mxu0 0.0
    %98 = vmatpush.msra.mxu0 0.0
    %99 = vmatpush.msra.mxu0 %v82
    %100 = vmatmul.f32.gmra.mxu0 %v78
    %v101 = vpop.f32.mrf.mxu0
    %v102 = vadd.f32 0.0, %v101
    %103 = vdwg.mxu0
    %vm104 = vcmask 17408
    %105 = vst.msk [vmem:[#allocation3] sm:$0x3] %vm104, %v102
    %s106 = scalar_lea.vmem %s3, 4
    %v107 = vld [vmem:[%s106] sm:$0x7]
    %s108 = scalar_lea.vmem %s1, 1
    %v109 = vld [vmem:[%s108] sm:$0x1]
    %v111 = vperm.slane %v109, 0
    %112 = vset.pattern.permute.xlu0 0
    %113 = vperm.xlu0 %112, %v111
    %v114 = vpop.permute.xlu0 %113
    %v116 = vmul.f32 %v107, %v114
    %s117 = scalar_lea.vmem %s4, 4
    %v118 = vld [vmem:[%s117] sm:$0x7]
    %v119 = vsel %vm34, %v118, 0.0
    %v120 = vrot.slane %v119, 4
    %v121 = vadd.f32 %v119, %v120
    %v122 = vrot.slane %v121, 2
    %v123 = vadd.f32 %v121, %v122
    %v124 = vrot.slane %v123, 1
    %v125 = vadd.f32 %v123, %v124
    %s126 = scalar_lea.vmem [#allocation2], 1
    %127 = vst.msk [vmem:[%s126] sm:$0x1] %vm42, %v125
    %128 = vxpose.xlu0.b32.start [1/16] %v116, 128
    %129 = vxpose.xlu0.b32.cont [2/16] 0.0, 128
    %130 = vxpose.xlu0.b32.cont [3/16] 0.0, 128
    %131 = vxpose.xlu0.b32.cont [4/16] 0.0, 128
    %132 = vxpose.xlu0.b32.cont [5/16] 0.0, 128
    %133 = vxpose.xlu0.b32.cont [6/16] 0.0, 128
    %134 = vxpose.xlu0.b32.cont [7/16] 0.0, 128
    %135 = vxpose.xlu0.b32.cont [8/16] 0.0, 128
    %136 = vxpose.xlu0.b32.cont [9/16] 0.0, 128
    %137 = vxpose.xlu0.b32.cont [10/16] 0.0, 128
    %138 = vxpose.xlu0.b32.cont [11/16] 0.0, 128
    %139 = vxpose.xlu0.b32.cont [12/16] 0.0, 128
    %140 = vxpose.xlu0.b32.cont [13/16] 0.0, 128
    %141 = vxpose.xlu0.b32.cont [14/16] 0.0, 128
    %142 = vxpose.xlu0.b32.cont [15/16] 0.0, 128
    %143 = vxpose.xlu0.b32.end [16/16] 0.0, 128
    %v144 = vpop.trf.xlu0
    %v145 = vpop.trf.xlu0
    %v146 = vpop.trf.xlu0
    %v147 = vpop.trf.xlu0
    %v148 = vpop.trf.xlu0
    %v149 = vpop.trf.xlu0
    %v150 = vpop.trf.xlu0
    %v151 = vpop.trf.xlu0
    %v152 = vpop.trf.xlu0
    %v153 = vpop.trf.xlu0
    %v154 = vpop.trf.xlu0
    %v155 = vpop.trf.xlu0
    %v156 = vpop.trf.xlu0
    %v157 = vpop.trf.xlu0
    %v158 = vpop.trf.xlu0
    %v159 = vpop.trf.xlu0
    %v161 = vsel %vm76, %v144, 0
    %v164 = vsel %vm80, %v118, 0
    %166 = vmatpush.msra.mxu0 0.0
    %167 = vmatpush.msra.mxu0 0.0
    %168 = vmatpush.msra.mxu0 0.0
    %169 = vmatpush.msra.mxu0 0.0
    %170 = vmatpush.msra.mxu0 0.0
    %171 = vmatpush.msra.mxu0 0.0
    %172 = vmatpush.msra.mxu0 0.0
    %173 = vmatpush.msra.mxu0 0.0
    %174 = vmatpush.msra.mxu0 0.0
    %175 = vmatpush.msra.mxu0 0.0
    %176 = vmatpush.msra.mxu0 0.0
    %177 = vmatpush.msra.mxu0 0.0
    %178 = vmatpush.msra.mxu0 0.0
    %179 = vmatpush.msra.mxu0 0.0
    %180 = vmatpush.msra.mxu0 0.0
    %181 = vmatpush.msra.mxu0 %v164
    %182 = vmatmul.f32.gmra.mxu0 %v161
    %v183 = vpop.f32.mrf.mxu0
    %v184 = vadd.f32 0.0, %v183
    %185 = vdwg.mxu0
    %s186 = scalar_lea.vmem [#allocation3], 2
    %187 = vst.msk [vmem:[%s186] sm:$0x3] %vm104, %v184
    %s188 = scalar_lea.vmem %s3, 8
    %v189 = vld [vmem:[%s188] sm:$0x7]
    %s190 = scalar_lea.vmem %s1, 2
    %v191 = vld [vmem:[%s190] sm:$0x1]
    %v193 = vperm.slane %v191, 0
    %194 = vset.pattern.permute.xlu0 0
    %195 = vperm.xlu0 %194, %v193
    %v196 = vpop.permute.xlu0 %195
    %v198 = vmul.f32 %v189, %v196
    %s199 = scalar_lea.vmem %s4, 8
    %v200 = vld [vmem:[%s199] sm:$0x7]
    %v201 = vsel %vm34, %v200, 0.0
    %v202 = vrot.slane %v201, 4
    %v203 = vadd.f32 %v201, %v202
    %v204 = vrot.slane %v203, 2
    %v205 = vadd.f32 %v203, %v204
    %v206 = vrot.slane %v205, 1
    %v207 = vadd.f32 %v205, %v206
    %s208 = scalar_lea.vmem [#allocation2], 2
    %209 = vst.msk [vmem:[%s208] sm:$0x1] %vm42, %v207
    %210 = vxpose.xlu0.b32.start [1/16] %v198, 128
    %211 = vxpose.xlu0.b32.cont [2/16] 0.0, 128
    %212 = vxpose.xlu0.b32.cont [3/16] 0.0, 128
    %213 = vxpose.xlu0.b32.cont [4/16] 0.0, 128
    %214 = vxpose.xlu0.b32.cont [5/16] 0.0, 128
    %215 = vxpose.xlu0.b32.cont [6/16] 0.0, 128
    %216 = vxpose.xlu0.b32.cont [7/16] 0.0, 128
    %217 = vxpose.xlu0.b32.cont [8/16] 0.0, 128
    %218 = vxpose.xlu0.b32.cont [9/16] 0.0, 128
    %219 = vxpose.xlu0.b32.cont [10/16] 0.0, 128
    %220 = vxpose.xlu0.b32.cont [11/16] 0.0, 128
    %221 = vxpose.xlu0.b32.cont [12/16] 0.0, 128
    %222 = vxpose.xlu0.b32.cont [13/16] 0.0, 128
    %223 = vxpose.xlu0.b32.cont [14/16] 0.0, 128
    %224 = vxpose.xlu0.b32.cont [15/16] 0.0, 128
    %225 = vxpose.xlu0.b32.end [16/16] 0.0, 128
    %v226 = vpop.trf.xlu0
    %v227 = vpop.trf.xlu0
    %v228 = vpop.trf.xlu0
    %v229 = vpop.trf.xlu0
    %v230 = vpop.trf.xlu0
    %v231 = vpop.trf.xlu0
    %v232 = vpop.trf.xlu0
    %v233 = vpop.trf.xlu0
    %v234 = vpop.trf.xlu0
    %v235 = vpop.trf.xlu0
    %v236 = vpop.trf.xlu0
    %v237 = vpop.trf.xlu0
    %v238 = vpop.trf.xlu0
    %v239 = vpop.trf.xlu0
    %v240 = vpop.trf.xlu0
    %v241 = vpop.trf.xlu0
    %v243 = vsel %vm76, %v226, 0
    %v246 = vsel %vm80, %v200, 0
    %248 = vmatpush.msra.mxu0 0.0
    %249 = vmatpush.msra.mxu0 0.0
    %250 = vmatpush.msra.mxu0 0.0
    %251 = vmatpush.msra.mxu0 0.0
    %252 = vmatpush.msra.mxu0 0.0
    %253 = vmatpush.msra.mxu0 0.0
    %254 = vmatpush.msra.mxu0 0.0
    %255 = vmatpush.msra.mxu0 0.0
    %256 = vmatpush.msra.mxu0 0.0
    %257 = vmatpush.msra.mxu0 0.0
    %258 = vmatpush.msra.mxu0 0.0
    %259 = vmatpush.msra.mxu0 0.0
    %260 = vmatpush.msra.mxu0 0.0
    %261 = vmatpush.msra.mxu0 0.0
    %262 = vmatpush.msra.mxu0 0.0
    %263 = vmatpush.msra.mxu0 %v246
    %264 = vmatmul.f32.gmra.mxu0 %v243
    %v265 = vpop.f32.mrf.mxu0
    %v266 = vadd.f32 0.0, %v265
    %267 = vdwg.mxu0
    %s268 = scalar_lea.vmem [#allocation3], 4
    %269 = vst.msk [vmem:[%s268] sm:$0x3] %vm104, %v266
    %s270 = scalar_lea.vmem %s3, 12
    %v271 = vld [vmem:[%s270] sm:$0x7]
    %s272 = scalar_lea.vmem %s1, 3
    %v273 = vld [vmem:[%s272] sm:$0x1]
    %v275 = vperm.slane %v273, 0
    %276 = vset.pattern.permute.xlu0 0
    %277 = vperm.xlu0 %276, %v275
    %v278 = vpop.permute.xlu0 %277
    %v280 = vmul.f32 %v271, %v278
    %s281 = scalar_lea.vmem %s4, 12
    %v282 = vld [vmem:[%s281] sm:$0x7]
    %v283 = vsel %vm34, %v282, 0.0
    %v284 = vrot.slane %v283, 4
    %v285 = vadd.f32 %v283, %v284
    %v286 = vrot.slane %v285, 2
    %v287 = vadd.f32 %v285, %v286
    %v288 = vrot.slane %v287, 1
    %v289 = vadd.f32 %v287, %v288
    %s290 = scalar_lea.vmem [#allocation2], 3
    %291 = vst.msk [vmem:[%s290] sm:$0x1] %vm42, %v289
    %292 = vxpose.xlu0.b32.start [1/16] %v280, 128
    %293 = vxpose.xlu0.b32.cont [2/16] 0.0, 128
    %294 = vxpose.xlu0.b32.cont [3/16] 0.0, 128
    %295 = vxpose.xlu0.b32.cont [4/16] 0.0, 128
    %296 = vxpose.xlu0.b32.cont [5/16] 0.0, 128
    %297 = vxpose.xlu0.b32.cont [6/16] 0.0, 128
    %298 = vxpose.xlu0.b32.cont [7/16] 0.0, 128
    %299 = vxpose.xlu0.b32.cont [8/16] 0.0, 128
    %300 = vxpose.xlu0.b32.cont [9/16] 0.0, 128
    %301 = vxpose.xlu0.b32.cont [10/16] 0.0, 128
    %302 = vxpose.xlu0.b32.cont [11/16] 0.0, 128
    %303 = vxpose.xlu0.b32.cont [12/16] 0.0, 128
    %304 = vxpose.xlu0.b32.cont [13/16] 0.0, 128
    %305 = vxpose.xlu0.b32.cont [14/16] 0.0, 128
    %306 = vxpose.xlu0.b32.cont [15/16] 0.0, 128
    %307 = vxpose.xlu0.b32.end [16/16] 0.0, 128
    %v308 = vpop.trf.xlu0
    %v309 = vpop.trf.xlu0
    %v310 = vpop.trf.xlu0
    %v311 = vpop.trf.xlu0
    %v312 = vpop.trf.xlu0
    %v313 = vpop.trf.xlu0
    %v314 = vpop.trf.xlu0
    %v315 = vpop.trf.xlu0
    %v316 = vpop.trf.xlu0
    %v317 = vpop.trf.xlu0
    %v318 = vpop.trf.xlu0
    %v319 = vpop.trf.xlu0
    %v320 = vpop.trf.xlu0
    %v321 = vpop.trf.xlu0
    %v322 = vpop.trf.xlu0
    %v323 = vpop.trf.xlu0
    %v325 = vsel %vm76, %v308, 0
    %v328 = vsel %vm80, %v282, 0
    %330 = vmatpush.msra.mxu0 0.0
    %331 = vmatpush.msra.mxu0 0.0
    %332 = vmatpush.msra.mxu0 0.0
    %333 = vmatpush.msra.mxu0 0.0
    %334 = vmatpush.msra.mxu0 0.0
    %335 = vmatpush.msra.mxu0 0.0
    %336 = vmatpush.msra.mxu0 0.0
    %337 = vmatpush.msra.mxu0 0.0
    %338 = vmatpush.msra.mxu0 0.0
    %339 = vmatpush.msra.mxu0 0.0
    %340 = vmatpush.msra.mxu0 0.0
    %341 = vmatpush.msra.mxu0 0.0
    %342 = vmatpush.msra.mxu0 0.0
    %343 = vmatpush.msra.mxu0 0.0
    %344 = vmatpush.msra.mxu0 0.0
    %345 = vmatpush.msra.mxu0 %v328
    %346 = vmatmul.f32.gmra.mxu0 %v325
    %v347 = vpop.f32.mrf.mxu0
    %v348 = vadd.f32 0.0, %v347
    %349 = vdwg.mxu0
    %s350 = scalar_lea.vmem [#allocation3], 6
    %351 = vst.msk [vmem:[%s350] sm:$0x3] %vm104, %v348
  $region25: #{tpu_custom_call.1} parent=0 // pred_fallthru
    _
  %v352 = vld [vmem:[%s2] sm:$0x7]
  %v353 = vld [vmem:[%s0] sm:$0x1]
  %v355 = vperm.slane %v353, 0
  %356 = vset.pattern.permute.xlu0 0
  %357 = vperm.xlu0 %356, %v355
  %v358 = vpop.permute.xlu0 %357
  %v360 = vmul.f32 %v352, %v358
  %v361 = vld [vmem:[#allocation2] sm:$0x1]
  %v362 = vld [vmem:[#allocation3] sm:$0x3]
  %vm363 = vcmask 15360
  %v365 = vsel %vm363, %v360, 0
  %vm367 = vcmask 1041408
  %v369 = vsel %vm367, %v362, 0
  %371 = vmatpush.msra.mxu0 0.0
  %372 = vmatpush.msra.mxu0 0.0
  %373 = vmatpush.msra.mxu0 0.0
  %374 = vmatpush.msra.mxu0 0.0
  %375 = vmatpush.msra.mxu0 0.0
  %376 = vmatpush.msra.mxu0 0.0
  %377 = vmatpush.msra.mxu0 0.0
  %378 = vmatpush.msra.mxu0 0.0
  %379 = vmatpush.msra.mxu0 0.0
  %380 = vmatpush.msra.mxu0 0.0
  %381 = vmatpush.msra.mxu0 0.0
  %382 = vmatpush.msra.mxu0 0.0
  %383 = vmatpush.msra.mxu0 0.0
  %384 = vmatpush.msra.mxu0 0.0
  %385 = vmatpush.msra.mxu0 0.0
  %386 = vmatpush.msra.mxu0 %v369
  %387 = vmatmul.f32.gmra.mxu0 %v365
  %v388 = vpop.f32.mrf.mxu0
  %v389 = vadd.f32 0.0, %v388
  %390 = vdwg.mxu0
  %v392 = vperm.slane %v361, 0
  %v394 = vadd.f32 %v392, %v389
  %vm395 = vcmask 18432
  %396 = vst.msk [vmem:[#allocation4] sm:$0x7] %vm395, %v394
  %v397 = vld [vmem:[#allocation4] sm:$0x7]
  %399 = vset.pattern.permute.xlu0 2
  %400 = vperm.xlu0 %399, %v397
  %v401 = vpop.permute.xlu0 %400
  %v403 = vrcp.pop %v401
  %v404 = vmul.f32 %v401, %v403
  %v405 = vsub.f32 1.0, %v404
  %v406 = vmul.f32 %v403, %v405
  %v407 = vadd.f32 %v403, %v406
  %vm408 = vweird.f32 %v401
  %vm409 = vweird.f32 %v403
  %vm410 = vmor %vm408, %vm409
  %v411 = vsel %vm410, %v403, %v407
  %v412 = vand.u32 2147483647, %v401
  %vm413 = vcmp.eq.f32.partialorder %v412, 8.507059e+37
  %v414 = vand.u32 %v401, 2147483648
  %v415 = vor.u32 1.1754944e-38, %v414
  %v416 = vsel %vm413, %v415, %v411
  %v417 = vmul.f32 %v397, %v416
  %vm418 = vcmask 10240
  %419 = vst.msk [vmem:[%s5] sm:$0x7] %vm418, %v417
  %s420 = scalar_lea.vmem %s2, 4
  %v421 = vld [vmem:[%s420] sm:$0x7]
  %s422 = scalar_lea.vmem %s0, 1
  %v423 = vld [vmem:[%s422] sm:$0x1]
  %v425 = vperm.slane %v423, 0
  %426 = vset.pattern.permute.xlu0 0
  %427 = vperm.xlu0 %426, %v425
  %v428 = vpop.permute.xlu0 %427
  %v430 = vmul.f32 %v421, %v428
  %s431 = scalar_lea.vmem [#allocation2], 1
  %v432 = vld [vmem:[%s431] sm:$0x1]
  %s433 = scalar_lea.vmem [#allocation3], 2
  %v434 = vld [vmem:[%s433] sm:$0x3]
  %v436 = vsel %vm363, %v430, 0
  %v439 = vsel %vm367, %v434, 0
  %441 = vmatpush.msra.mxu0 0.0
  %442 = vmatpush.msra.mxu0 0.0
  %443 = vmatpush.msra.mxu0 0.0
  %444 = vmatpush.msra.mxu0 0.0
  %445 = vmatpush.msra.mxu0 0.0
  %446 = vmatpush.msra.mxu0 0.0
  %447 = vmatpush.msra.mxu0 0.0
  %448 = vmatpush.msra.mxu0 0.0
  %449 = vmatpush.msra.mxu0 0.0
  %450 = vmatpush.msra.mxu0 0.0
  %451 = vmatpush.msra.mxu0 0.0
  %452 = vmatpush.msra.mxu0 0.0
  %453 = vmatpush.msra.mxu0 0.0
  %454 = vmatpush.msra.mxu0 0.0
  %455 = vmatpush.msra.mxu0 0.0
  %456 = vmatpush.msra.mxu0 %v439
  %457 = vmatmul.f32.gmra.mxu0 %v436
  %v458 = vpop.f32.mrf.mxu0
  %v459 = vadd.f32 0.0, %v458
  %460 = vdwg.mxu0
  %v462 = vperm.slane %v432, 0
  %v464 = vadd.f32 %v462, %v459
  %465 = vst.msk [vmem:[#allocation4] sm:$0x7] %vm395, %v464
  %v466 = vld [vmem:[#allocation4] sm:$0x7]
  %468 = vset.pattern.permute.xlu0 2
  %469 = vperm.xlu0 %468, %v466
  %v470 = vpop.permute.xlu0 %469
  %v472 = vrcp.pop %v470
  %v473 = vmul.f32 %v470, %v472
  %v474 = vsub.f32 1.0, %v473
  %v475 = vmul.f32 %v472, %v474
  %v476 = vadd.f32 %v472, %v475
  %vm477 = vweird.f32 %v470
  %vm478 = vweird.f32 %v472
  %vm479 = vmor %vm477, %vm478
  %v480 = vsel %vm479, %v472, %v476
  %v481 = vand.u32 2147483647, %v470
  %vm482 = vcmp.eq.f32.partialorder %v481, 8.507059e+37
  %v483 = vand.u32 %v470, 2147483648
  %v484 = vor.u32 1.1754944e-38, %v483
  %v485 = vsel %vm482, %v484, %v480
  %v486 = vmul.f32 %v466, %v485
  %s487 = scalar_lea.vmem %s5, 4
  %488 = vst.msk [vmem:[%s487] sm:$0x7] %vm418, %v486
  %s489 = scalar_lea.vmem %s2, 8
  %v490 = vld [vmem:[%s489] sm:$0x7]
  %s491 = scalar_lea.vmem %s0, 2
  %v492 = vld [vmem:[%s491] sm:$0x1]
  %v494 = vperm.slane %v492, 0
  %495 = vset.pattern.permute.xlu0 0
  %496 = vperm.xlu0 %495, %v494
  %v497 = vpop.permute.xlu0 %496
  %v499 = vmul.f32 %v490, %v497
  %s500 = scalar_lea.vmem [#allocation2], 2
  %v501 = vld [vmem:[%s500] sm:$0x1]
  %s502 = scalar_lea.vmem [#allocation3], 4
  %v503 = vld [vmem:[%s502] sm:$0x3]
  %v505 = vsel %vm363, %v499, 0
  %v508 = vsel %vm367, %v503, 0
  %510 = vmatpush.msra.mxu0 0.0
  %511 = vmatpush.msra.mxu0 0.0
  %512 = vmatpush.msra.mxu0 0.0
  %513 = vmatpush.msra.mxu0 0.0
  %514 = vmatpush.msra.mxu0 0.0
  %515 = vmatpush.msra.mxu0 0.0
  %516 = vmatpush.msra.mxu0 0.0
  %517 = vmatpush.msra.mxu0 0.0
  %518 = vmatpush.msra.mxu0 0.0
  %519 = vmatpush.msra.mxu0 0.0
  %520 = vmatpush.msra.mxu0 0.0
  %521 = vmatpush.msra.mxu0 0.0
  %522 = vmatpush.msra.mxu0 0.0
  %523 = vmatpush.msra.mxu0 0.0
  %524 = vmatpush.msra.mxu0 0.0
  %525 = vmatpush.msra.mxu0 %v508
  %526 = vmatmul.f32.gmra.mxu0 %v505
  %v527 = vpop.f32.mrf.mxu0
  %v528 = vadd.f32 0.0, %v527
  %529 = vdwg.mxu0
  %v531 = vperm.slane %v501, 0
  %v533 = vadd.f32 %v531, %v528
  %534 = vst.msk [vmem:[#allocation4] sm:$0x7] %vm395, %v533
  %v535 = vld [vmem:[#allocation4] sm:$0x7]
  %537 = vset.pattern.permute.xlu0 2
  %538 = vperm.xlu0 %537, %v535
  %v539 = vpop.permute.xlu0 %538
  %v541 = vrcp.pop %v539
  %v542 = vmul.f32 %v539, %v541
  %v543 = vsub.f32 1.0, %v542
  %v544 = vmul.f32 %v541, %v543
  %v545 = vadd.f32 %v541, %v544
  %vm546 = vweird.f32 %v539
  %vm547 = vweird.f32 %v541
  %vm548 = vmor %vm546, %vm547
  %v549 = vsel %vm548, %v541, %v545
  %v550 = vand.u32 2147483647, %v539
  %vm551 = vcmp.eq.f32.partialorder %v550, 8.507059e+37
  %v552 = vand.u32 %v539, 2147483648
  %v553 = vor.u32 1.1754944e-38, %v552
  %v554 = vsel %vm551, %v553, %v549
  %v555 = vmul.f32 %v535, %v554
  %s556 = scalar_lea.vmem %s5, 8
  %557 = vst.msk [vmem:[%s556] sm:$0x7] %vm418, %v555
  %s558 = scalar_lea.vmem %s2, 12
  %v559 = vld [vmem:[%s558] sm:$0x7]
  %s560 = scalar_lea.vmem %s0, 3
  %v561 = vld [vmem:[%s560] sm:$0x1]
  %v563 = vperm.slane %v561, 0
  %564 = vset.pattern.permute.xlu0 0
  %565 = vperm.xlu0 %564, %v563
  %v566 = vpop.permute.xlu0 %565
  %v568 = vmul.f32 %v559, %v566
  %s569 = scalar_lea.vmem [#allocation2], 3
  %v570 = vld [vmem:[%s569] sm:$0x1]
  %s571 = scalar_lea.vmem [#allocation3], 6
  %v572 = vld [vmem:[%s571] sm:$0x3]
  %v574 = vsel %vm363, %v568, 0
  %v577 = vsel %vm367, %v572, 0
  %579 = vmatpush.msra.mxu0 0.0
  %580 = vmatpush.msra.mxu0 0.0
  %581 = vmatpush.msra.mxu0 0.0
  %582 = vmatpush.msra.mxu0 0.0
  %583 = vmatpush.msra.mxu0 0.0
  %584 = vmatpush.msra.mxu0 0.0
  %585 = vmatpush.msra.mxu0 0.0
  %586 = vmatpush.msra.mxu0 0.0
  %587 = vmatpush.msra.mxu0 0.0
  %588 = vmatpush.msra.mxu0 0.0
  %589 = vmatpush.msra.mxu0 0.0
  %590 = vmatpush.msra.mxu0 0.0
  %591 = vmatpush.msra.mxu0 0.0
  %592 = vmatpush.msra.mxu0 0.0
  %593 = vmatpush.msra.mxu0 0.0
  %594 = vmatpush.msra.mxu0 %v577
  %595 = vmatmul.f32.gmra.mxu0 %v574
  %v596 = vpop.f32.mrf.mxu0
  %v597 = vadd.f32 0.0, %v596
  %598 = vdwg.mxu0
  %v600 = vperm.slane %v570, 0
  %v602 = vadd.f32 %v600, %v597
  %603 = vst.msk [vmem:[#allocation4] sm:$0x7] %vm395, %v602
  %v604 = vld [vmem:[#allocation4] sm:$0x7]
  %606 = vset.pattern.permute.xlu0 2
  %607 = vperm.xlu0 %606, %v604
  %v608 = vpop.permute.xlu0 %607
  %v610 = vrcp.pop %v608
  %v611 = vmul.f32 %v608, %v610
  %v612 = vsub.f32 1.0, %v611
  %v613 = vmul.f32 %v610, %v612
  %v614 = vadd.f32 %v610, %v613
  %vm615 = vweird.f32 %v608
  %vm616 = vweird.f32 %v610
  %vm617 = vmor %vm615, %vm616
  %v618 = vsel %vm617, %v610, %v614
  %v619 = vand.u32 2147483647, %v608
  %vm620 = vcmp.eq.f32.partialorder %v619, 8.507059e+37
  %v621 = vand.u32 %v608, 2147483648
  %v622 = vor.u32 1.1754944e-38, %v621
  %v623 = vsel %vm620, %v622, %v618
  %v624 = vmul.f32 %v604, %v623
  %s625 = scalar_lea.vmem %s5, 12
  %626 = vst.msk [vmem:[%s625] sm:$0x7] %vm418, %v624
  // Predicated region
  $region26: #{tpu_custom_call.1} parent=0 // pred_check
    _
  $region27: #{tpu_custom_call.1} parent=0 // pred_check_branch
    %628 = sbr.rel (0) target = $region29
  $region28: #{tpu_custom_call.1} parent=0 // pred_region
    _
  $region29: #{tpu_custom_call.1} parent=0 // pred_fallthru
    _
  // Predicated region
  $region30: #{tpu_custom_call.1} parent=0 // pred_check
    _
  $region31: #{tpu_custom_call.1} parent=0 // pred_check_branch
    %630 = sbr.rel (0) target = $region33
  $region32: #{tpu_custom_call.1} parent=0 // pred_region
    _
  $region33: #{tpu_custom_call.1} parent=0 // pred_fallthru
    _

</llo_original>
